<compile_context>
chip_gen: v7x
topology: tpu7x:2x2x1
jax: 0.10.0
libtpu: 0.0.40
codegen_flags: <defaults>
</compile_context>

<pallas_src>
import functools

import jax
import jax.numpy as jnp
import numpy as np
from jax.experimental import pallas as pl
from jax.experimental.pallas import tpu as pltpu


def _choose_row_tile(M):
    """Largest row tile (mult. of 8) dividing M that still yields >=2 grid steps."""
    for tm in (512, 256, 128, 64, 32, 16, 8):   # 512 keeps VMEM bounded on v7x
        if M % tm == 0 and M // tm >= 2:
            return tm
    return M


# ----------------------------------------------------------------------------
# Kernel A: fused "head" = 1x1 conv1 + BN + ReLU  AND  1x1 shortcut conv + BN
#           (shares a single read of x; tiled over M = N*Ho*Wo)
# ----------------------------------------------------------------------------
def _fused_head_kernel(x_ref, w1_ref, s1_ref, b1_ref, wsc_ref, ssc_ref, bsc_ref,
                       h1_ref, sc_ref):
    x = x_ref[...].astype(jnp.bfloat16)                       # (TM, Cin) bf16 MXU input
    h1 = jnp.dot(x, w1_ref[...], preferred_element_type=jnp.float32)
    h1 = jnp.maximum(h1 * s1_ref[...] + b1_ref[...], 0.0)     # f32 epilogue
    h1_ref[...] = h1.astype(h1_ref.dtype)                     # bf16 intermediate
    sc = jnp.dot(x, wsc_ref[...], preferred_element_type=jnp.float32)
    sc_ref[...] = (sc * ssc_ref[...] + bsc_ref[...]).astype(sc_ref.dtype)  # f32


def fused_head(x2d, w1, s1, b1, wsc, ssc, bsc, *, tm):
    M, Cin = x2d.shape
    F1 = w1.shape[1]
    F3 = wsc.shape[1]
    flops = 2 * M * Cin * (F1 + F3)
    bytes_accessed = 4 * M * Cin + 2 * Cin * (F1 + F3) + 8 * (F1 + F3) \
        + 2 * M * F1 + 4 * M * F3
    return pl.pallas_call(
        _fused_head_kernel,
        grid=(M // tm,),
        in_specs=[
            pl.BlockSpec((tm, Cin), lambda i: (i, 0)),        # x tile (pipelined)
            pl.BlockSpec((Cin, F1), lambda i: (0, 0)),        # resident weights
            pl.BlockSpec((1, F1), lambda i: (0, 0)),
            pl.BlockSpec((1, F1), lambda i: (0, 0)),
            pl.BlockSpec((Cin, F3), lambda i: (0, 0)),
            pl.BlockSpec((1, F3), lambda i: (0, 0)),
            pl.BlockSpec((1, F3), lambda i: (0, 0)),
        ],
        out_specs=(
            pl.BlockSpec((tm, F1), lambda i: (i, 0)),
            pl.BlockSpec((tm, F3), lambda i: (i, 0)),
        ),
        out_shape=(
            jax.ShapeDtypeStruct((M, F1), jnp.bfloat16),      # h1 (bf16 to halve HBM)
            jax.ShapeDtypeStruct((M, F3), jnp.float32),       # shortcut (f32 residual)
        ),
        compiler_params=pltpu.CompilerParams(dimension_semantics=("parallel",)),
        cost_estimate=pl.CostEstimate(flops=flops, transcendentals=0,
                                      bytes_accessed=bytes_accessed),
    )(x2d, w1, s1.reshape(1, F1), b1.reshape(1, F1),
      wsc, ssc.reshape(1, F3), bsc.reshape(1, F3))


# ----------------------------------------------------------------------------
# Kernel B: fxf grouped conv (stride 1, pre-padded input) + BN + ReLU
#   grouped conv realized as f*f full (Cin,Cout) matmuls with a block-diagonal
#   weight per tap; single f32 accumulator, direct store (no concatenate).
# ----------------------------------------------------------------------------
def _grouped_conv_bn_relu_kernel(xp_ref, w_ref, scale_ref, bias_ref, o_ref,
                                 *, f, H2, W2):
    Cin = xp_ref.shape[-1]
    Cout = o_ref.shape[-1]
    xp = xp_ref[0].astype(jnp.float32)                 # (Hp, Wp, Cin), one upcast
    acc = jnp.zeros((H2 * W2, Cout), jnp.float32)
    for dy in range(f):
        for dx in range(f):
            patch = xp[dy:dy + H2, dx:dx + W2, :].reshape(H2 * W2, Cin)
            acc = acc + jnp.dot(patch.astype(jnp.bfloat16), w_ref[dy * f + dx],
                                preferred_element_type=jnp.float32)
    y = acc * scale_ref[...] + bias_ref[...]
    o_ref[0] = jnp.maximum(y, 0.0).astype(o_ref.dtype)


def grouped_conv_bn_relu(h1p, w_taps, scale, bias, *, f, H2, W2):
    # h1p: (N, Hp, Wp, Cin) bf16 pre-padded; w_taps: (f*f, Cin, Cout) block-diag bf16
    N, Hp, Wp, Cin = h1p.shape
    Cout = w_taps.shape[-1]
    kernel = functools.partial(_grouped_conv_bn_relu_kernel, f=f, H2=H2, W2=W2)
    flops = 2 * N * H2 * W2 * f * f * Cin * Cout
    bytes_accessed = 2 * (N * Hp * Wp * Cin + f * f * Cin * Cout
                          + N * H2 * W2 * Cout) + 8 * Cout
    # TODO(synk): for large feature maps, tile over H rows with a 1-row halo so
    # the per-image block + accumulator stay within v7x's 64 MiB VMEM.
    return pl.pallas_call(
        kernel,
        grid=(N,),
        in_specs=[
            pl.BlockSpec((1, Hp, Wp, Cin), lambda n: (n, 0, 0, 0)),
            pl.BlockSpec((f * f, Cin, Cout), lambda n: (0, 0, 0)),   # resident
            pl.BlockSpec((1, Cout), lambda n: (0, 0)),
            pl.BlockSpec((1, Cout), lambda n: (0, 0)),
        ],
        out_specs=pl.BlockSpec((1, H2 * W2, Cout), lambda n: (n, 0, 0)),
        out_shape=jax.ShapeDtypeStruct((N, H2 * W2, Cout), jnp.bfloat16),
        compiler_params=pltpu.CompilerParams(dimension_semantics=("parallel",)),
        cost_estimate=pl.CostEstimate(flops=flops, transcendentals=0,
                                      bytes_accessed=bytes_accessed),
    )(h1p, w_taps, scale.reshape(1, Cout), bias.reshape(1, Cout))


# ----------------------------------------------------------------------------
# Kernel C: 1x1 conv3 + BN + residual add + ReLU (tiled over M)
# ----------------------------------------------------------------------------
def _pw_bn_add_relu_kernel(x_ref, w_ref, s_ref, b_ref, res_ref, o_ref):
    y = jnp.dot(x_ref[...], w_ref[...], preferred_element_type=jnp.float32)
    y = y * s_ref[...] + b_ref[...] + res_ref[...]
    o_ref[...] = jnp.maximum(y, 0.0).astype(o_ref.dtype)


def pointwise_bn_add_relu(x2d, w, scale, bias, residual, *, tm):
    M, Cin = x2d.shape
    Cout = w.shape[1]
    flops = 2 * M * Cin * Cout
    bytes_accessed = 2 * M * Cin + 2 * Cin * Cout + 8 * Cout + 4 * M * Cout * 2
    return pl.pallas_call(
        _pw_bn_add_relu_kernel,
        grid=(M // tm,),
        in_specs=[
            pl.BlockSpec((tm, Cin), lambda i: (i, 0)),
            pl.BlockSpec((Cin, Cout), lambda i: (0, 0)),      # resident
            pl.BlockSpec((1, Cout), lambda i: (0, 0)),
            pl.BlockSpec((1, Cout), lambda i: (0, 0)),
            pl.BlockSpec((tm, Cout), lambda i: (i, 0)),       # residual tile
        ],
        out_specs=pl.BlockSpec((tm, Cout), lambda i: (i, 0)),
        out_shape=jax.ShapeDtypeStruct((M, Cout), jnp.float32),
        compiler_params=pltpu.CompilerParams(dimension_semantics=("parallel",)),
        cost_estimate=pl.CostEstimate(flops=flops, transcendentals=0,
                                      bytes_accessed=bytes_accessed),
    )(x2d, w, scale.reshape(1, Cout), bias.reshape(1, Cout), residual)


# ----------------------------------------------------------------------------
# Glue: parameter folding + full ConvBlock forward
# ----------------------------------------------------------------------------
def fold_bn(gamma, beta, mean, var, eps=1e-5):
    scale = gamma / jnp.sqrt(var + eps)
    bias = beta - mean * scale
    return scale.astype(jnp.float32), bias.astype(jnp.float32)


def expand_grouped_weight(w_hwio, groups):
    """(f, f, Cin//g, Cout) grouped HWIO -> (f*f, Cin, Cout) block-diagonal taps."""
    fh, fw, cin_g, Cout = w_hwio.shape
    cout_g = Cout // groups
    Cin = cin_g * groups
    w_full = jnp.zeros((fh, fw, Cin, Cout), w_hwio.dtype)
    for g in range(groups):
        w_full = w_full.at[:, :, g * cin_g:(g + 1) * cin_g,
                           g * cout_g:(g + 1) * cout_g].set(
            w_hwio[:, :, :, g * cout_g:(g + 1) * cout_g])
    return w_full.reshape(fh * fw, Cin, Cout)


def conv_block_forward(x_nchw, params, *, f, groups, s):
    # x_nchw: (N, Cin, H, W)  ->  returns (N, F3, H_out, W_out)
    x = jnp.transpose(x_nchw, (0, 2, 3, 1)).astype(jnp.float32)   # NHWC
    N, H, W, Cin = x.shape
    # TODO(synk): stride-s subsample is still an XLA strided slice; folding it
    # into the head kernel needs a strided/Element index_map.
    xs = x[:, ::s, ::s, :]
    Ho, Wo = xs.shape[1], xs.shape[2]
    M = N * Ho * Wo
    xs2d = xs.reshape(M, Cin)
    tm = _choose_row_tile(M)

    bf = lambda a: a.astype(jnp.bfloat16)

    # fused head: conv1 (1x1, stride s) + BN + ReLU  and  shortcut (1x1) + BN
    s1, b1 = fold_bn(*params["bn1"])
    ssc, bsc = fold_bn(*params["bn_sc"])
    h1, shortcut = fused_head(xs2d, bf(params["w1"]), s1, b1,
                              bf(params["w_sc"]), ssc, bsc, tm=tm)

    # grouped fxf conv, stride 1, padding=1 (PyTorch padding=True -> 1)
    F1 = params["w1"].shape[1]
    pad = 1
    H2 = Ho + 2 * pad - f + 1
    W2 = Wo + 2 * pad - f + 1
    # TODO(synk): the halo pad is still an XLA-side copy of h1; could be folded
    # into the grouped-conv kernel via an overlapping index_map / in-kernel fill.
    h1p = jnp.pad(h1.reshape(N, Ho, Wo, F1),
                  ((0, 0), (pad, pad), (pad, pad), (0, 0)))
    s2, b2 = fold_bn(*params["bn2"])
    w_taps = bf(expand_grouped_weight(params["w2"], groups))
    h2 = grouped_conv_bn_relu(h1p, w_taps, s2, b2, f=f, H2=H2, W2=W2)

    # residual add requires matching spatial shapes (f == 2*pad+1), same as PyTorch.
    assert (H2, W2) == (Ho, Wo), "residual shape mismatch (need f == 2*pad+1)"

    # conv3 (1x1) + BN + residual + ReLU, fused
    s3, b3 = fold_bn(*params["bn3"])
    F2, F3 = params["w3"].shape
    out2d = pointwise_bn_add_relu(h2.reshape(M, F2), bf(params["w3"]), s3, b3,
                                  shortcut, tm=tm)
    out = out2d.reshape(N, Ho, Wo, F3)
    return jnp.transpose(out, (0, 3, 1, 2))                      # back to NCHW


def init_params(key, in_channel, f, filters, groups):
    F1, F2, F3 = filters
    ks = jax.random.split(key, 4)

    def w(k, shape, fan_in):
        return jax.random.normal(k, shape, jnp.float32) / jnp.sqrt(float(fan_in))

    def bn(c, i):
        idx = jnp.arange(c, dtype=jnp.float32)
        gamma = 1.0 + 0.1 * jnp.cos(idx + i)
        beta = 0.05 * jnp.sin(idx - i)
        mean = 0.02 * idx
        var = 1.0 + 0.1 * idx / c
        return gamma, beta, mean, var

    return {
        # 1x1 conv weights stored as (Cin, Cout) matmul matrices
        "w1": w(ks[0], (in_channel, F1), in_channel),
        # grouped fxf conv stored HWIO: (f, f, F1//groups, F2)
        "w2": w(ks[1], (f, f, F1 // groups, F2), f * f * F1 // groups),
        "w3": w(ks[2], (F2, F3), F2),
        "w_sc": w(ks[3], (in_channel, F3), in_channel),
        "bn1": bn(F1, 1),
        "bn2": bn(F2, 2),
        "bn3": bn(F3, 3),
        "bn_sc": bn(F3, 4),
    }


# Pure-JAX reference (lax.conv, same bf16-input / f32-accumulate discipline).
def reference_forward(x_nchw, params, *, f, groups, s):
    x = jnp.transpose(x_nchw, (0, 2, 3, 1)).astype(jnp.float32)
    dn = ("NHWC", "HWIO", "NHWC")
    bf = lambda a: a.astype(jnp.bfloat16)

    def conv(x, w, stride=1, pad="VALID", g=1):
        return jax.lax.conv_general_dilated(
            bf(x), bf(w), (stride, stride), pad, dimension_numbers=dn,
            feature_group_count=g, preferred_element_type=jnp.float32)

    def bn(x, p):
        scale, bias = fold_bn(*p)
        return x * scale + bias

    w1 = params["w1"].reshape(1, 1, *params["w1"].shape)
    w3 = params["w3"].reshape(1, 1, *params["w3"].shape)
    wsc = params["w_sc"].reshape(1, 1, *params["w_sc"].shape)

    sc = bn(conv(x, wsc, stride=s), params["bn_sc"])
    h = jax.nn.relu(bn(conv(x, w1, stride=s), params["bn1"]))
    h = jax.nn.relu(
        bn(conv(h, params["w2"], stride=1, pad=((1, 1), (1, 1)), g=groups),
           params["bn2"]))
    h = bn(conv(h, w3), params["bn3"])
    out = jax.nn.relu(h + sc)
    return jnp.transpose(out, (0, 3, 1, 2))


if __name__ == "__main__":
    in_channel, f, filters, groups, s = 4, 3, (8, 8, 16), 2, 2
    key = jax.random.PRNGKey(0)
    kx, kp = jax.random.split(key)

    x = jax.random.normal(kx, (2, in_channel, 16, 16), jnp.float32)
    params = init_params(kp, in_channel, f, filters, groups)

    out = jax.block_until_ready(conv_block_forward(x, params, f=f, groups=groups, s=s))
    assert out.shape == (2, filters[2], 16 // s, 16 // s), out.shape

    ref = reference_forward(x, params, f=f, groups=groups, s=s)
    # bf16 MXU inputs with f32 accumulation -> compare at bf16-level tolerance.
    np.testing.assert_allclose(np.asarray(out), np.asarray(ref), atol=1e-2, rtol=1e-2)

    print("KERNEL_OK")
</pallas_src>

<mosaic_0001>
module attributes {stable_mosaic.version = 11 : i64} {
  func.func @_fused_head_kernel(%arg0: i32, %arg1: memref<64x4xf32, #tpu.memory_space<vmem>>, %arg2: memref<4x8xbf16, #tpu.memory_space<vmem>>, %arg3: memref<1x8xf32, #tpu.memory_space<vmem>>, %arg4: memref<1x8xf32, #tpu.memory_space<vmem>>, %arg5: memref<4x16xbf16, #tpu.memory_space<vmem>>, %arg6: memref<1x16xf32, #tpu.memory_space<vmem>>, %arg7: memref<1x16xf32, #tpu.memory_space<vmem>>, %arg8: memref<64x8xbf16, #tpu.memory_space<vmem>>, %arg9: memref<64x16xf32, #tpu.memory_space<vmem>>) attributes {dimension_semantics = [#tpu.dimension_semantics<parallel>], iteration_bounds = array<i64: 2>, scalar_prefetch = 0 : i64, scratch_operands = 0 : i64, tpu.core_type = #tpu.core_type<tc>, window_params = [{transform_indices = @transform_0, window_bounds = array<i64: 64, 4>}, {pipeline_mode = #tpu.pipeline_mode<synchronous>, transform_indices = @transform_1, window_bounds = array<i64: 4, 8>}, {pipeline_mode = #tpu.pipeline_mode<synchronous>, transform_indices = @transform_2, window_bounds = array<i64: 1, 8>}, {pipeline_mode = #tpu.pipeline_mode<synchronous>, transform_indices = @transform_3, window_bounds = array<i64: 1, 8>}, {pipeline_mode = #tpu.pipeline_mode<synchronous>, transform_indices = @transform_4, window_bounds = array<i64: 4, 16>}, {pipeline_mode = #tpu.pipeline_mode<synchronous>, transform_indices = @transform_5, window_bounds = array<i64: 1, 16>}, {pipeline_mode = #tpu.pipeline_mode<synchronous>, transform_indices = @transform_6, window_bounds = array<i64: 1, 16>}, {transform_indices = @transform_7, window_bounds = array<i64: 64, 8>}, {transform_indices = @transform_8, window_bounds = array<i64: 64, 16>}]} {
    %c0 = arith.constant 0 : index
    %c0_0 = arith.constant 0 : index
    %0 = vector.load %arg1[%c0, %c0_0] : memref<64x4xf32, #tpu.memory_space<vmem>>, vector<64x4xf32>
    %1 = arith.truncf %0 : vector<64x4xf32> to vector<64x4xbf16>
    %c0_1 = arith.constant 0 : index
    %c0_2 = arith.constant 0 : index
    %2 = vector.load %arg2[%c0_1, %c0_2] : memref<4x8xbf16, #tpu.memory_space<vmem>>, vector<4x8xbf16>
    %cst = arith.constant dense<0.000000e+00> : vector<64x8xf32>
    %3 = tpu.matmul %1, %2, %cst {dimension_numbers = #tpu.dot_dimension_numbers<[1], [0], [0], [1], [0, 0, 1, 1], [], []>} : vector<64x4xbf16>, vector<4x8xbf16>, vector<64x8xf32> -> vector<64x8xf32>
    %c0_3 = arith.constant 0 : index
    %c0_4 = arith.constant 0 : index
    %4 = vector.load %arg3[%c0_3, %c0_4] : memref<1x8xf32, #tpu.memory_space<vmem>>, vector<1x8xf32>
    %5 = vector.broadcast %4 : vector<1x8xf32> to vector<64x8xf32>
    %6 = arith.mulf %3, %5 : vector<64x8xf32>
    %c0_5 = arith.constant 0 : index
    %c0_6 = arith.constant 0 : index
    %7 = vector.load %arg4[%c0_5, %c0_6] : memref<1x8xf32, #tpu.memory_space<vmem>>, vector<1x8xf32>
    %8 = vector.broadcast %7 : vector<1x8xf32> to vector<64x8xf32>
    %9 = arith.addf %6, %8 : vector<64x8xf32>
    %cst_7 = arith.constant 0.000000e+00 : f32
    %10 = vector.broadcast %cst_7 : f32 to vector<64x8xf32>
    %11 = arith.maximumf %9, %10 : vector<64x8xf32>
    %12 = arith.truncf %11 : vector<64x8xf32> to vector<64x8xbf16>
    %c0_8 = arith.constant 0 : index
    %c0_9 = arith.constant 0 : index
    %13 = vector.load %arg8[%c0_8, %c0_9] : memref<64x8xbf16, #tpu.memory_space<vmem>>, vector<64x8xbf16>
    tpu.vector_store %arg8[%c0_8, %c0_9], %12 {strides = array<i32>} : memref<64x8xbf16, #tpu.memory_space<vmem>>, vector<64x8xbf16>,
    %c0_10 = arith.constant 0 : index
    %c0_11 = arith.constant 0 : index
    %14 = vector.load %arg5[%c0_10, %c0_11] : memref<4x16xbf16, #tpu.memory_space<vmem>>, vector<4x16xbf16>
    %cst_12 = arith.constant dense<0.000000e+00> : vector<64x16xf32>
    %15 = tpu.matmul %1, %14, %cst_12 {dimension_numbers = #tpu.dot_dimension_numbers<[1], [0], [0], [1], [0, 0, 1, 1], [], []>} : vector<64x4xbf16>, vector<4x16xbf16>, vector<64x16xf32> -> vector<64x16xf32>
    %c0_13 = arith.constant 0 : index
    %c0_14 = arith.constant 0 : index
    %16 = vector.load %arg6[%c0_13, %c0_14] : memref<1x16xf32, #tpu.memory_space<vmem>>, vector<1x16xf32>
    %17 = vector.broadcast %16 : vector<1x16xf32> to vector<64x16xf32>
    %18 = arith.mulf %15, %17 : vector<64x16xf32>
    %c0_15 = arith.constant 0 : index
    %c0_16 = arith.constant 0 : index
    %19 = vector.load %arg7[%c0_15, %c0_16] : memref<1x16xf32, #tpu.memory_space<vmem>>, vector<1x16xf32>
    %20 = vector.broadcast %19 : vector<1x16xf32> to vector<64x16xf32>
    %21 = arith.addf %18, %20 : vector<64x16xf32>
    %c0_17 = arith.constant 0 : index
    %c0_18 = arith.constant 0 : index
    %22 = vector.load %arg9[%c0_17, %c0_18] : memref<64x16xf32, #tpu.memory_space<vmem>>, vector<64x16xf32>
    tpu.vector_store %arg9[%c0_17, %c0_18], %21 {strides = array<i32>} : memref<64x16xf32, #tpu.memory_space<vmem>>, vector<64x16xf32>,
    return
  }
  func.func @transform_0(%arg0: i32) -> (i32, i32) {
    %c0_i32 = arith.constant 0 : i32
    %c0_i32_0 = arith.constant 0 : i32
    return %arg0, %c0_i32 : i32, i32
  }
  func.func @transform_1(%arg0: i32) -> (i32, i32) {
    %c0_i32 = arith.constant 0 : i32
    %c0_i32_0 = arith.constant 0 : i32
    %c0_i32_1 = arith.constant 0 : i32
    return %c0_i32, %c0_i32_0 : i32, i32
  }
  func.func @transform_2(%arg0: i32) -> (i32, i32) {
    %c0_i32 = arith.constant 0 : i32
    %c0_i32_0 = arith.constant 0 : i32
    %c0_i32_1 = arith.constant 0 : i32
    return %c0_i32, %c0_i32_0 : i32, i32
  }
  func.func @transform_3(%arg0: i32) -> (i32, i32) {
    %c0_i32 = arith.constant 0 : i32
    %c0_i32_0 = arith.constant 0 : i32
    %c0_i32_1 = arith.constant 0 : i32
    return %c0_i32, %c0_i32_0 : i32, i32
  }
  func.func @transform_4(%arg0: i32) -> (i32, i32) {
    %c0_i32 = arith.constant 0 : i32
    %c0_i32_0 = arith.constant 0 : i32
    %c0_i32_1 = arith.constant 0 : i32
    return %c0_i32, %c0_i32_0 : i32, i32
  }
  func.func @transform_5(%arg0: i32) -> (i32, i32) {
    %c0_i32 = arith.constant 0 : i32
    %c0_i32_0 = arith.constant 0 : i32
    %c0_i32_1 = arith.constant 0 : i32
    return %c0_i32, %c0_i32_0 : i32, i32
  }
  func.func @transform_6(%arg0: i32) -> (i32, i32) {
    %c0_i32 = arith.constant 0 : i32
    %c0_i32_0 = arith.constant 0 : i32
    %c0_i32_1 = arith.constant 0 : i32
    return %c0_i32, %c0_i32_0 : i32, i32
  }
  func.func @transform_7(%arg0: i32) -> (i32, i32) {
    %c0_i32 = arith.constant 0 : i32
    %c0_i32_0 = arith.constant 0 : i32
    return %arg0, %c0_i32 : i32, i32
  }
  func.func @transform_8(%arg0: i32) -> (i32, i32) {
    %c0_i32 = arith.constant 0 : i32
    %c0_i32_0 = arith.constant 0 : i32
    return %arg0, %c0_i32 : i32, i32
  }
}

</mosaic_0001>

<llo_original>
// kernel: tpu_custom_call.1
$region0: #{tpu_custom_call.1}
  #allocation0 [shape = 'u32[]', space=smem, size = 0x4, offset = 0x4, fixed_abs, tag = 'smem constant byte address 0x4 - core index']
  #allocation1 [shape = 'u32[144,128]{1,0:T(1,128)}', space=vmem, size = 0x12000, scoped, tag = 'internal scratch']
  %s0 = inlined_call_operand.vmem [shape: f32[128,4], index: 0, kind: input, shape index: {}]
  %s1 = inlined_call_operand.vmem [shape: bf16[4,8], index: 1, kind: input, shape index: {}]
  %s2 = inlined_call_operand.vmem [shape: f32[1,8], index: 2, kind: input, shape index: {}]
  %s3 = inlined_call_operand.vmem [shape: f32[1,8], index: 3, kind: input, shape index: {}]
  %s4 = inlined_call_operand.vmem [shape: bf16[4,16], index: 4, kind: input, shape index: {}]
  %s5 = inlined_call_operand.vmem [shape: f32[1,16], index: 5, kind: input, shape index: {}]
  %s6 = inlined_call_operand.vmem [shape: f32[1,16], index: 6, kind: input, shape index: {}]
  %s7 = inlined_call_operand.vmem [shape: bf16[128,8], index: 7, kind: output, shape index: {0}]
  %s8 = inlined_call_operand.vmem [shape: f32[128,16], index: 8, kind: output, shape index: {1}]
  %9 = xla_tuple %s7, %s8
  %s10 = sld [smem:[#allocation0]]
  $region69: #{tpu_custom_call.1} parent=0
    _
  %s12 = ssub.s32 1, %s10
  %s13 = scalar_select 0, %s12, %s10
  loop: start=0, step=1, limit=4
  $region2: #{tpu_custom_call.1} parent=0 // loop_pre_header
    _
  $region3: #{tpu_custom_call.1} parent=0 // loop_header
    %s15 = sphi 0, %s19
    %p16 = scmp.ge.s32.totalorder %s15, 4
    %s25 = sphi 0, %s27
    %s28 = sphi 0, %s25
    %s29 = sphi 0, %s28
    %s45 = sphi 0, %s29
    %s49 = sphi 0, %s49
    %s51 = sphi 0, %s49
    %s52 = sphi 0, %s51
    %s66 = sphi 0, %s52
    %s70 = sphi 0, %s70
    %s72 = sphi 0, %s70
    %s73 = sphi 0, %s72
    %s87 = sphi 0, %s73
    %s91 = sphi 0, %s91
    %s93 = sphi 0, %s91
    %s94 = sphi 0, %s93
    %s108 = sphi 0, %s94
    %s112 = sphi 0, %s112
    %s114 = sphi 0, %s112
    %s115 = sphi 0, %s114
    %s129 = sphi 0, %s115
    %s133 = sphi 0, %s133
    %s135 = sphi 0, %s133
    %s136 = sphi 0, %s135
    %s150 = sphi 0, %s136
    %s154 = sphi 0, %s154
    %s156 = sphi 0, %s154
    %s157 = sphi 0, %s156
    %s171 = sphi 0, %s157
    %s177 = sphi 0, %s179
    %s180 = sphi 0, %s177
    %s181 = sphi 0, %s180
    %s197 = sphi 0, %s181
    %s203 = sphi 0, %s205
    %s206 = sphi 0, %s203
    %s207 = sphi 0, %s206
    %s223 = sphi 0, %s207
  $region4: #{tpu_custom_call.1} parent=0 // loop_header_branch
    %18 = sbr.rel (%p16) target = $region8
  $region5: #{tpu_custom_call.1} parent=0 // loop_body
    %s20 = ssub.s32 %s15, 1
    %s21 = ssub.s32 %s15, 2
    %s22 = sadd.s32 %s15, 1
    %s23 = ssub.s32 %s15, %s22
    %p24 = scmp.eq.s32.totalorder %s23, 0
    %s26 = sadd.s32 %s25, 1
    %s27 = scalar_select %p24, %s25, %s26
    %p30 = pneg %p24
    %p31 = scmp.eq.s32.totalorder %s15, 1
    %p32 = por %p30, %p31
    %p33 = scmp.ne.s32.totalorder %s25, %s28
    %p34 = scmp.eq.s32.totalorder %s15, 0
    %p35 = por %p33, %p34
    %p36 = scmp.ne.s32.totalorder %s25, %s28
    %p37 = scmp.eq.s32.totalorder %s20, 1
    %p38 = por %p36, %p37
    %p39 = scmp.ne.s32.totalorder %s28, %s29
    %p40 = scmp.eq.s32.totalorder %s20, 0
    %p41 = por %p39, %p40
    %p42 = scmp.ne.s32.totalorder %s28, %s29
    %p43 = scmp.eq.s32.totalorder %s21, 1
    %p44 = por %p42, %p43
    %p46 = scmp.ne.s32.totalorder %s29, %s45
    %p47 = scmp.eq.s32.totalorder %s21, 0
    %p48 = por %p46, %p47
    %s50 = sadd.s32 %s49, 1
    %p53 = scmp.eq.s32.totalorder %s15, 1
    %p54 = scmp.ne.s32.totalorder %s49, %s51
    %p55 = scmp.eq.s32.totalorder %s15, 0
    %p56 = por %p54, %p55
    %p57 = scmp.ne.s32.totalorder %s49, %s51
    %p58 = scmp.eq.s32.totalorder %s20, 1
    %p59 = por %p57, %p58
    %p60 = scmp.ne.s32.totalorder %s51, %s52
    %p61 = scmp.eq.s32.totalorder %s20, 0
    %p62 = por %p60, %p61
    %p63 = scmp.ne.s32.totalorder %s51, %s52
    %p64 = scmp.eq.s32.totalorder %s21, 1
    %p65 = por %p63, %p64
    %p67 = scmp.ne.s32.totalorder %s52, %s66
    %p68 = scmp.eq.s32.totalorder %s21, 0
    %p69 = por %p67, %p68
    %s71 = sadd.s32 %s70, 1
    %p74 = scmp.eq.s32.totalorder %s15, 1
    %p75 = scmp.ne.s32.totalorder %s70, %s72
    %p76 = scmp.eq.s32.totalorder %s15, 0
    %p77 = por %p75, %p76
    %p78 = scmp.ne.s32.totalorder %s70, %s72
    %p79 = scmp.eq.s32.totalorder %s20, 1
    %p80 = por %p78, %p79
    %p81 = scmp.ne.s32.totalorder %s72, %s73
    %p82 = scmp.eq.s32.totalorder %s20, 0
    %p83 = por %p81, %p82
    %p84 = scmp.ne.s32.totalorder %s72, %s73
    %p85 = scmp.eq.s32.totalorder %s21, 1
    %p86 = por %p84, %p85
    %p88 = scmp.ne.s32.totalorder %s73, %s87
    %p89 = scmp.eq.s32.totalorder %s21, 0
    %p90 = por %p88, %p89
    %s92 = sadd.s32 %s91, 1
    %p95 = scmp.eq.s32.totalorder %s15, 1
    %p96 = scmp.ne.s32.totalorder %s91, %s93
    %p97 = scmp.eq.s32.totalorder %s15, 0
    %p98 = por %p96, %p97
    %p99 = scmp.ne.s32.totalorder %s91, %s93
    %p100 = scmp.eq.s32.totalorder %s20, 1
    %p101 = por %p99, %p100
    %p102 = scmp.ne.s32.totalorder %s93, %s94
    %p103 = scmp.eq.s32.totalorder %s20, 0
    %p104 = por %p102, %p103
    %p105 = scmp.ne.s32.totalorder %s93, %s94
    %p106 = scmp.eq.s32.totalorder %s21, 1
    %p107 = por %p105, %p106
    %p109 = scmp.ne.s32.totalorder %s94, %s108
    %p110 = scmp.eq.s32.totalorder %s21, 0
    %p111 = por %p109, %p110
    %s113 = sadd.s32 %s112, 1
    %p116 = scmp.eq.s32.totalorder %s15, 1
    %p117 = scmp.ne.s32.totalorder %s112, %s114
    %p118 = scmp.eq.s32.totalorder %s15, 0
    %p119 = por %p117, %p118
    %p120 = scmp.ne.s32.totalorder %s112, %s114
    %p121 = scmp.eq.s32.totalorder %s20, 1
    %p122 = por %p120, %p121
    %p123 = scmp.ne.s32.totalorder %s114, %s115
    %p124 = scmp.eq.s32.totalorder %s20, 0
    %p125 = por %p123, %p124
    %p126 = scmp.ne.s32.totalorder %s114, %s115
    %p127 = scmp.eq.s32.totalorder %s21, 1
    %p128 = por %p126, %p127
    %p130 = scmp.ne.s32.totalorder %s115, %s129
    %p131 = scmp.eq.s32.totalorder %s21, 0
    %p132 = por %p130, %p131
    %s134 = sadd.s32 %s133, 1
    %p137 = scmp.eq.s32.totalorder %s15, 1
    %p138 = scmp.ne.s32.totalorder %s133, %s135
    %p139 = scmp.eq.s32.totalorder %s15, 0
    %p140 = por %p138, %p139
    %p141 = scmp.ne.s32.totalorder %s133, %s135
    %p142 = scmp.eq.s32.totalorder %s20, 1
    %p143 = por %p141, %p142
    %p144 = scmp.ne.s32.totalorder %s135, %s136
    %p145 = scmp.eq.s32.totalorder %s20, 0
    %p146 = por %p144, %p145
    %p147 = scmp.ne.s32.totalorder %s135, %s136
    %p148 = scmp.eq.s32.totalorder %s21, 1
    %p149 = por %p147, %p148
    %p151 = scmp.ne.s32.totalorder %s136, %s150
    %p152 = scmp.eq.s32.totalorder %s21, 0
    %p153 = por %p151, %p152
    %s155 = sadd.s32 %s154, 1
    %p158 = scmp.eq.s32.totalorder %s15, 1
    %p159 = scmp.ne.s32.totalorder %s154, %s156
    %p160 = scmp.eq.s32.totalorder %s15, 0
    %p161 = por %p159, %p160
    %p162 = scmp.ne.s32.totalorder %s154, %s156
    %p163 = scmp.eq.s32.totalorder %s20, 1
    %p164 = por %p162, %p163
    %p165 = scmp.ne.s32.totalorder %s156, %s157
    %p166 = scmp.eq.s32.totalorder %s20, 0
    %p167 = por %p165, %p166
    %p168 = scmp.ne.s32.totalorder %s156, %s157
    %p169 = scmp.eq.s32.totalorder %s21, 1
    %p170 = por %p168, %p169
    %p172 = scmp.ne.s32.totalorder %s157, %s171
    %p173 = scmp.eq.s32.totalorder %s21, 0
    %p174 = por %p172, %p173
    %s175 = ssub.s32 %s15, %s22
    %p176 = scmp.eq.s32.totalorder %s175, 0
    %s178 = sadd.s32 %s177, 1
    %s179 = scalar_select %p176, %s177, %s178
    %p182 = pneg %p176
    %p183 = scmp.eq.s32.totalorder %s15, 1
    %p184 = por %p182, %p183
    %p185 = scmp.ne.s32.totalorder %s177, %s180
    %p186 = scmp.eq.s32.totalorder %s15, 0
    %p187 = por %p185, %p186
    %p188 = scmp.ne.s32.totalorder %s177, %s180
    %p189 = scmp.eq.s32.totalorder %s20, 1
    %p190 = por %p188, %p189
    %p191 = scmp.ne.s32.totalorder %s180, %s181
    %p192 = scmp.eq.s32.totalorder %s20, 0
    %p193 = por %p191, %p192
    %p194 = scmp.ne.s32.totalorder %s180, %s181
    %p195 = scmp.eq.s32.totalorder %s21, 1
    %p196 = por %p194, %p195
    %p198 = scmp.ne.s32.totalorder %s181, %s197
    %p199 = scmp.eq.s32.totalorder %s21, 0
    %p200 = por %p198, %p199
    %s201 = ssub.s32 %s15, %s22
    %p202 = scmp.eq.s32.totalorder %s201, 0
    %s204 = sadd.s32 %s203, 1
    %s205 = scalar_select %p202, %s203, %s204
    %p208 = pneg %p202
    %p209 = scmp.eq.s32.totalorder %s15, 1
    %p210 = por %p208, %p209
    %p211 = scmp.ne.s32.totalorder %s203, %s206
    %p212 = scmp.eq.s32.totalorder %s15, 0
    %p213 = por %p211, %p212
    %p214 = scmp.ne.s32.totalorder %s203, %s206
    %p215 = scmp.eq.s32.totalorder %s20, 1
    %p216 = por %p214, %p215
    %p217 = scmp.ne.s32.totalorder %s206, %s207
    %p218 = scmp.eq.s32.totalorder %s20, 0
    %p219 = por %p217, %p218
    %p220 = scmp.ne.s32.totalorder %s206, %s207
    %p221 = scmp.eq.s32.totalorder %s21, 1
    %p222 = por %p220, %p221
    %p224 = scmp.ne.s32.totalorder %s207, %s223
    %p225 = scmp.eq.s32.totalorder %s21, 0
    %p226 = por %p224, %p225
    %p227 = scmp.le.s32.totalorder 1, %s15
    %p228 = scmp.lt.s32.totalorder %s15, 3
    %p229 = pnand %p227, %p228
    %p230 = pneg %p229
    // Predicated region
    $region9: #{tpu_custom_call.1} parent=5 // pred_check
      _
    $region10: #{tpu_custom_call.1} parent=5 // pred_check_branch
      %232 = sbr.rel (%p229) target = $region12
    $region11: #{tpu_custom_call.1} parent=5 // pred_region
      %s233 = ssub.s32 %s15, 1
      // Predicated region
      $region13: #{tpu_custom_call.1} parent=11 // pred_check
        %p234 = pneg %p62
      $region14: #{tpu_custom_call.1} parent=11 // pred_check_branch
        %236 = sbr.rel (%p234) target = $region16
      $region15: #{tpu_custom_call.1} parent=11 // pred_region
        _
      $region16: #{tpu_custom_call.1} parent=11 // pred_fallthru
        _
      // Predicated region
      $region17: #{tpu_custom_call.1} parent=11 // pred_check
        %p237 = pneg %p83
      $region18: #{tpu_custom_call.1} parent=11 // pred_check_branch
        %239 = sbr.rel (%p237) target = $region20
      $region19: #{tpu_custom_call.1} parent=11 // pred_region
        _
      $region20: #{tpu_custom_call.1} parent=11 // pred_fallthru
        _
      // Predicated region
      $region21: #{tpu_custom_call.1} parent=11 // pred_check
        %p240 = pneg %p104
      $region22: #{tpu_custom_call.1} parent=11 // pred_check_branch
        %242 = sbr.rel (%p240) target = $region24
      $region23: #{tpu_custom_call.1} parent=11 // pred_region
        _
      $region24: #{tpu_custom_call.1} parent=11 // pred_fallthru
        _
      // Predicated region
      $region25: #{tpu_custom_call.1} parent=11 // pred_check
        %p243 = pneg %p125
      $region26: #{tpu_custom_call.1} parent=11 // pred_check_branch
        %245 = sbr.rel (%p243) target = $region28
      $region27: #{tpu_custom_call.1} parent=11 // pred_region
        _
      $region28: #{tpu_custom_call.1} parent=11 // pred_fallthru
        _
      // Predicated region
      $region29: #{tpu_custom_call.1} parent=11 // pred_check
        %p246 = pneg %p146
      $region30: #{tpu_custom_call.1} parent=11 // pred_check_branch
        %248 = sbr.rel (%p246) target = $region32
      $region31: #{tpu_custom_call.1} parent=11 // pred_region
        _
      $region32: #{tpu_custom_call.1} parent=11 // pred_fallthru
        _
      // Predicated region
      $region33: #{tpu_custom_call.1} parent=11 // pred_check
        %p249 = pneg %p167
      $region34: #{tpu_custom_call.1} parent=11 // pred_check_branch
        %251 = sbr.rel (%p249) target = $region36
      $region35: #{tpu_custom_call.1} parent=11 // pred_region
        _
      $region36: #{tpu_custom_call.1} parent=11 // pred_fallthru
        _
    $region12: #{tpu_custom_call.1} parent=5 // pred_fallthru
      _
    %p252 = scmp.lt.s32.totalorder %s15, 2
    // Predicated region
    $region37: #{tpu_custom_call.1} parent=5 // pred_check
      %p253 = pneg %p252
    $region38: #{tpu_custom_call.1} parent=5 // pred_check_branch
      %255 = sbr.rel (%p253) target = $region40
    $region39: #{tpu_custom_call.1} parent=5 // pred_region
      // Predicated region
      $region41: #{tpu_custom_call.1} parent=39 // pred_check
        %p256 = pneg %p35
      $region42: #{tpu_custom_call.1} parent=39 // pred_check_branch
        %258 = sbr.rel (%p256) target = $region44
      $region43: #{tpu_custom_call.1} parent=39 // pred_region
        %s259 = smul.u32 8, %s15
        %p260 = scmp.lt.s32.totalorder %s259, 15
        %s261 = scalar_select %p260, %s259, 15
        %s262 = smul.addr %s261, 8
        %s263 = scalar_lea.vmem %s0, %s262
        %s264 = smul.u32 8, %s15
      $region44: #{tpu_custom_call.1} parent=39 // pred_fallthru
        _
    $region40: #{tpu_custom_call.1} parent=5 // pred_fallthru
      _
    %p265 = scmp.le.s32.totalorder 1, %s15
    %p266 = scmp.lt.s32.totalorder %s15, 3
    %p267 = pnand %p265, %p266
    %p268 = pneg %p267
    // Predicated region
    $region45: #{tpu_custom_call.1} parent=5 // pred_check
      _
    $region46: #{tpu_custom_call.1} parent=5 // pred_check_branch
      %270 = sbr.rel (%p267) target = $region48
    $region47: #{tpu_custom_call.1} parent=5 // pred_region
      %s271 = ssub.s32 %s15, 1
      %s272 = smul.u32 8, %s20
      %p273 = scmp.lt.s32.totalorder %s272, 15
      %s274 = scalar_select %p273, %s272, 15
      %s275 = smul.addr %s274, 8
      %s276 = scalar_lea.vmem %s0, %s275
      %p277 = pneg %p41
      %p278 = pneg %p38
      %p279 = pneg %p62
      %p280 = pneg %p59
      %p281 = pneg %p83
      %p282 = pneg %p80
      %p283 = pneg %p104
      %p284 = pneg %p101
      %p285 = pneg %p125
      %p286 = pneg %p122
      %p287 = pneg %p146
      %p288 = pneg %p143
      %p289 = pneg %p167
      %p290 = pneg %p164
      %p291 = pneg %p193
      %p292 = pneg %p190
      %s293 = smul.u32 8, %s20
      %p294 = scmp.lt.s32.totalorder %s293, 15
      %s295 = scalar_select %p294, %s293, 15
      %s296 = smul.addr %s295, 4
      %s297 = scalar_lea.vmem %s7, %s296
      %p298 = pneg %p219
      %p299 = pneg %p216
      %s300 = smul.u32 8, %s20
      %p301 = scmp.lt.s32.totalorder %s300, 15
      %s302 = scalar_select %p301, %s300, 15
      %s303 = smul.addr %s302, 8
      %s304 = scalar_lea.vmem %s8, %s303
      %s305 = smul.u32 8, %s20
      %p306 = scmp.lt.s32.totalorder %s305, 15
      %s307 = scalar_select %p306, %s305, 15
      %s308 = smul.addr %s307, 8
      %s309 = scalar_lea.vmem %s0, %s308
      %s310 = smul.u32 8, %s20
      %s311 = smul.u32 8, %s20
      %p312 = scmp.lt.s32.totalorder %s311, 15
      %s313 = scalar_select %p312, %s311, 15
      %s314 = smul.addr %s313, 4
      %s315 = scalar_lea.vmem %s7, %s314
      %s316 = smul.u32 8, %s20
      %s317 = smul.u32 8, %s20
      %p318 = scmp.lt.s32.totalorder %s317, 15
      %s319 = scalar_select %p318, %s317, 15
      %s320 = smul.addr %s319, 8
      %s321 = scalar_lea.vmem %s8, %s320
      %s322 = smul.u32 8, %s20
      %v324 = vld [vmem:[%s309] sm:$0xff]
      %v325 = vld [vmem:[%s309 + $0x8] sm:$0xff]
      %v326 = vld [vmem:[%s309 + $0x10] sm:$0xff]
      %v327 = vld [vmem:[%s309 + $0x18] sm:$0xff]
      %v328 = vld [vmem:[%s309 + $0x20] sm:$0xff]
      %v329 = vld [vmem:[%s309 + $0x28] sm:$0xff]
      %v330 = vld [vmem:[%s309 + $0x30] sm:$0xff]
      %v331 = vld [vmem:[%s309 + $0x38] sm:$0xff]
      %v332 = vpack.c.bf16 %v325, %v324
      %v333 = vpack.c.bf16 %v327, %v326
      %v334 = vpack.c.bf16 %v329, %v328
      %v335 = vpack.c.bf16 %v331, %v330
      %v336 = vld [vmem:[%s1] sm:$0x3]
      %vm337 = vcmask 31744
      %v339 = vsel %vm337, %v332, 0
      %v342 = vsel %vm337, %v333, 0
      %v345 = vsel %vm337, %v334, 0
      %v348 = vsel %vm337, %v335, 0
      %vm350 = vcmask 1041408
      %v352 = vsel %vm350, %v336, 0
      %354 = vmatprep.subr.bf16.mxu0 0
      %355 = vmatpush1.bf16.msra.mxu0 %v352
      %356 = vmatprep.subr.bf16.mxu0 0
      %357 = vmatpush1.bf16.msra.mxu0 0
      %358 = vmatprep.subr.bf16.mxu0 0
      %359 = vmatpush1.bf16.msra.mxu0 0
      %360 = vmatprep.subr.bf16.mxu0 0
      %361 = vmatpush1.bf16.msra.mxu0 0
      %362 = vmatprep.subr.bf16.mxu0 0
      %363 = vmatpush1.bf16.msra.mxu0 0
      %364 = vmatprep.subr.bf16.mxu0 0
      %365 = vmatpush1.bf16.msra.mxu0 0
      %366 = vmatprep.subr.bf16.mxu0 0
      %367 = vmatpush1.bf16.msra.mxu0 0
      %368 = vmatprep.subr.bf16.mxu0 0
      %369 = vmatpush1.bf16.msra.mxu0 0
      %370 = vmatprep.subr.bf16.mxu0 0
      %371 = vmatpush1.bf16.msra.mxu0 0
      %372 = vmatprep.subr.bf16.mxu0 0
      %373 = vmatpush1.bf16.msra.mxu0 0
      %374 = vmatprep.subr.bf16.mxu0 0
      %375 = vmatpush1.bf16.msra.mxu0 0
      %376 = vmatprep.subr.bf16.mxu0 0
      %377 = vmatpush1.bf16.msra.mxu0 0
      %378 = vmatprep.subr.bf16.mxu0 0
      %379 = vmatpush1.bf16.msra.mxu0 0
      %380 = vmatprep.subr.bf16.mxu0 0
      %381 = vmatpush1.bf16.msra.mxu0 0
      %382 = vmatprep.subr.bf16.mxu0 0
      %383 = vmatpush1.bf16.msra.mxu0 0
      %384 = vmatprep.subr.bf16.mxu0 0
      %385 = vmatpush1.bf16.msra.mxu0 0
      %386 = vmatprep.mubr.bf16.mxu0 0
      %387 = vmatmul.mubr.bf16.gmra.mrb[0].mxu0 %v339
      %v388 = vpop.f32.mrb[0].mxu0
      %v389 = vadd.f32 0.0, %v388
      %v390 = vpop.f32.mrb[0].mxu0
      %v391 = vpop.f32.mrb[0].mxu0
      %v392 = vadd.f32 0.0, %v391
      %v393 = vpop.f32.mrb[0].mxu0
      %394 = vmatprep.mubr.bf16.mxu0 0
      %395 = vmatmul.mubr.bf16.gmra.mrb[0].mxu0 %v342
      %v396 = vpop.f32.mrb[0].mxu0
      %v397 = vadd.f32 0.0, %v396
      %v398 = vpop.f32.mrb[0].mxu0
      %v399 = vpop.f32.mrb[0].mxu0
      %v400 = vadd.f32 0.0, %v399
      %v401 = vpop.f32.mrb[0].mxu0
      %402 = vmatprep.mubr.bf16.mxu0 0
      %403 = vmatmul.mubr.bf16.gmra.mrb[0].mxu0 %v345
      %v404 = vpop.f32.mrb[0].mxu0
      %v405 = vadd.f32 0.0, %v404
      %v406 = vpop.f32.mrb[0].mxu0
      %v407 = vpop.f32.mrb[0].mxu0
      %v408 = vadd.f32 0.0, %v407
      %v409 = vpop.f32.mrb[0].mxu0
      %410 = vmatprep.mubr.bf16.mxu0 0
      %411 = vmatmul.mubr.bf16.gmra.mrb[0].mxu0 %v348
      %v412 = vpop.f32.mrb[0].mxu0
      %v413 = vadd.f32 0.0, %v412
      %v414 = vpop.f32.mrb[0].mxu0
      %v415 = vpop.f32.mrb[0].mxu0
      %v416 = vadd.f32 0.0, %v415
      %v417 = vpop.f32.mrb[0].mxu0
      %418 = vdwg.mxu0
      %v419 = vld [vmem:[%s2] sm:$0x1]
      %v421 = vlaneseq
      %v422 = vshrl.u32 %v421, 7
      %v423 = vsub.s32 0, %v422
      %v424 = vrot.slane %v419, %v423
      %v426 = vmul.f32 %v389, %v424
      %v427 = vmul.f32 %v392, %v424
      %v428 = vmul.f32 %v397, %v424
      %v429 = vmul.f32 %v400, %v424
      %v430 = vmul.f32 %v405, %v424
      %v431 = vmul.f32 %v408, %v424
      %v432 = vmul.f32 %v413, %v424
      %v433 = vmul.f32 %v416, %v424
      %v434 = vld [vmem:[%s3] sm:$0x1]
      %v436 = vlaneseq
      %v437 = vshrl.u32 %v436, 7
      %v438 = vsub.s32 0, %v437
      %v439 = vrot.slane %v434, %v438
      %v441 = vadd.f32 %v426, %v439
      %v442 = vadd.f32 %v427, %v439
      %v443 = vadd.f32 %v428, %v439
      %v444 = vadd.f32 %v429, %v439
      %v445 = vadd.f32 %v430, %v439
      %v446 = vadd.f32 %v431, %v439
      %v447 = vadd.f32 %v432, %v439
      %v448 = vadd.f32 %v433, %v439
      %v449 = vmax.f32 %v441, 0.0
      %v450 = vmax.f32 %v442, 0.0
      %v451 = vmax.f32 %v443, 0.0
      %v452 = vmax.f32 %v444, 0.0
      %v453 = vmax.f32 %v445, 0.0
      %v454 = vmax.f32 %v446, 0.0
      %v455 = vmax.f32 %v447, 0.0
      %v456 = vmax.f32 %v448, 0.0
      %v457 = vpack.c.bf16 %v450, %v449
      %v458 = vpack.c.bf16 %v452, %v451
      %v459 = vpack.c.bf16 %v454, %v453
      %v460 = vpack.c.bf16 %v456, %v455
      %v465 = vunpack.c.l.b16 %v457
      %v466 = vunpack.c.h.b16 %v457
      %v467 = vunpack.c.l.b16 %v458
      %v468 = vunpack.c.h.b16 %v458
      %v469 = vunpack.c.l.b16 %v459
      %v470 = vunpack.c.h.b16 %v459
      %v471 = vunpack.c.l.b16 %v460
      %v472 = vunpack.c.h.b16 %v460
      %v473 = vpack.c.b16 %v465, %v465
      %v474 = vpack.c.b16 %v466, %v466
      %v475 = vpack.c.b16 %v467, %v467
      %v476 = vpack.c.b16 %v468, %v468
      %v477 = vpack.c.b16 %v469, %v469
      %v478 = vpack.c.b16 %v470, %v470
      %v479 = vpack.c.b16 %v471, %v471
      %v480 = vpack.c.b16 %v472, %v472
      %vm489 = vcmask 60416
      %490 = vst.msk [vmem:[%s315] sm:$0xf] %vm489, %v473
      %491 = vst.msk [vmem:[%s315 + $0x4] sm:$0xf] %vm489, %v474
      %492 = vst.msk [vmem:[%s315 + $0x8] sm:$0xf] %vm489, %v475
      %493 = vst.msk [vmem:[%s315 + $0xc] sm:$0xf] %vm489, %v476
      %494 = vst.msk [vmem:[%s315 + $0x10] sm:$0xf] %vm489, %v477
      %495 = vst.msk [vmem:[%s315 + $0x14] sm:$0xf] %vm489, %v478
      %496 = vst.msk [vmem:[%s315 + $0x18] sm:$0xf] %vm489, %v479
      %497 = vst.msk [vmem:[%s315 + $0x1c] sm:$0xf] %vm489, %v480
      %v498 = vld [vmem:[%s4] sm:$0x3]
      %v500 = vsel %vm350, %v498, 0
      %502 = vmatprep.subr.bf16.mxu0 0
      %503 = vmatpush1.bf16.msra.mxu0 %v500
      %504 = vmatprep.subr.bf16.mxu0 0
      %505 = vmatpush1.bf16.msra.mxu0 0
      %506 = vmatprep.subr.bf16.mxu0 0
      %507 = vmatpush1.bf16.msra.mxu0 0
      %508 = vmatprep.subr.bf16.mxu0 0
      %509 = vmatpush1.bf16.msra.mxu0 0
      %510 = vmatprep.subr.bf16.mxu0 0
      %511 = vmatpush1.bf16.msra.mxu0 0
      %512 = vmatprep.subr.bf16.mxu0 0
      %513 = vmatpush1.bf16.msra.mxu0 0
      %514 = vmatprep.subr.bf16.mxu0 0
      %515 = vmatpush1.bf16.msra.mxu0 0
      %516 = vmatprep.subr.bf16.mxu0 0
      %517 = vmatpush1.bf16.msra.mxu0 0
      %518 = vmatprep.subr.bf16.mxu0 0
      %519 = vmatpush1.bf16.msra.mxu0 0
      %520 = vmatprep.subr.bf16.mxu0 0
      %521 = vmatpush1.bf16.msra.mxu0 0
      %522 = vmatprep.subr.bf16.mxu0 0
      %523 = vmatpush1.bf16.msra.mxu0 0
      %524 = vmatprep.subr.bf16.mxu0 0
      %525 = vmatpush1.bf16.msra.mxu0 0
      %526 = vmatprep.subr.bf16.mxu0 0
      %527 = vmatpush1.bf16.msra.mxu0 0
      %528 = vmatprep.subr.bf16.mxu0 0
      %529 = vmatpush1.bf16.msra.mxu0 0
      %530 = vmatprep.subr.bf16.mxu0 0
      %531 = vmatpush1.bf16.msra.mxu0 0
      %532 = vmatprep.subr.bf16.mxu0 0
      %533 = vmatpush1.bf16.msra.mxu0 0
      %534 = vmatprep.mubr.bf16.mxu0 0
      %535 = vmatmul.mubr.bf16.gmra.mrb[0].mxu0 %v339
      %v536 = vpop.f32.mrb[0].mxu0
      %v537 = vadd.f32 0.0, %v536
      %v538 = vpop.f32.mrb[0].mxu0
      %v539 = vpop.f32.mrb[0].mxu0
      %v540 = vadd.f32 0.0, %v539
      %v541 = vpop.f32.mrb[0].mxu0
      %542 = vmatprep.mubr.bf16.mxu0 0
      %543 = vmatmul.mubr.bf16.gmra.mrb[0].mxu0 %v342
      %v544 = vpop.f32.mrb[0].mxu0
      %v545 = vadd.f32 0.0, %v544
      %v546 = vpop.f32.mrb[0].mxu0
      %v547 = vpop.f32.mrb[0].mxu0
      %v548 = vadd.f32 0.0, %v547
      %v549 = vpop.f32.mrb[0].mxu0
      %550 = vmatprep.mubr.bf16.mxu0 0
      %551 = vmatmul.mubr.bf16.gmra.mrb[0].mxu0 %v345
      %v552 = vpop.f32.mrb[0].mxu0
      %v553 = vadd.f32 0.0, %v552
      %v554 = vpop.f32.mrb[0].mxu0
      %v555 = vpop.f32.mrb[0].mxu0
      %v556 = vadd.f32 0.0, %v555
      %v557 = vpop.f32.mrb[0].mxu0
      %558 = vmatprep.mubr.bf16.mxu0 0
      %559 = vmatmul.mubr.bf16.gmra.mrb[0].mxu0 %v348
      %v560 = vpop.f32.mrb[0].mxu0
      %v561 = vadd.f32 0.0, %v560
      %v562 = vpop.f32.mrb[0].mxu0
      %v563 = vpop.f32.mrb[0].mxu0
      %v564 = vadd.f32 0.0, %v563
      %v565 = vpop.f32.mrb[0].mxu0
      %566 = vdwg.mxu0
      %v567 = vld [vmem:[%s5] sm:$0x1]
      %v569 = vlaneseq
      %v570 = vshrl.u32 %v569, 7
      %v571 = vsub.s32 0, %v570
      %v572 = vrot.slane %v567, %v571
      %v574 = vmul.f32 %v537, %v572
      %v575 = vmul.f32 %v540, %v572
      %v576 = vmul.f32 %v545, %v572
      %v577 = vmul.f32 %v548, %v572
      %v578 = vmul.f32 %v553, %v572
      %v579 = vmul.f32 %v556, %v572
      %v580 = vmul.f32 %v561, %v572
      %v581 = vmul.f32 %v564, %v572
      %v582 = vld [vmem:[%s6] sm:$0x1]
      %v584 = vlaneseq
      %v585 = vshrl.u32 %v584, 7
      %v586 = vsub.s32 0, %v585
      %v587 = vrot.slane %v582, %v586
      %v589 = vadd.f32 %v574, %v587
      %v590 = vadd.f32 %v575, %v587
      %v591 = vadd.f32 %v576, %v587
      %v592 = vadd.f32 %v577, %v587
      %v593 = vadd.f32 %v578, %v587
      %v594 = vadd.f32 %v579, %v587
      %v595 = vadd.f32 %v580, %v587
      %v596 = vadd.f32 %v581, %v587
      %vm597 = vcmask 130048
      %598 = vst.msk [vmem:[%s321] sm:$0xff] %vm597, %v589
      %599 = vst.msk [vmem:[%s321 + $0x8] sm:$0xff] %vm597, %v590
      %600 = vst.msk [vmem:[%s321 + $0x10] sm:$0xff] %vm597, %v591
      %601 = vst.msk [vmem:[%s321 + $0x18] sm:$0xff] %vm597, %v592
      %602 = vst.msk [vmem:[%s321 + $0x20] sm:$0xff] %vm597, %v593
      %603 = vst.msk [vmem:[%s321 + $0x28] sm:$0xff] %vm597, %v594
      %604 = vst.msk [vmem:[%s321 + $0x30] sm:$0xff] %vm597, %v595
      %605 = vst.msk [vmem:[%s321 + $0x38] sm:$0xff] %vm597, %v596
      %s606 = smul.u32 8, %s20
      %p607 = scmp.lt.s32.totalorder %s606, 15
      %s608 = scalar_select %p607, %s606, 15
      %s609 = smul.addr %s608, 4
      %s610 = scalar_lea.vmem %s7, %s609
      %s611 = smul.u32 8, %s20
      %p612 = scmp.lt.s32.totalorder %s611, 15
      %s613 = scalar_select %p612, %s611, 15
      %s614 = smul.addr %s613, 8
      %s615 = scalar_lea.vmem %s8, %s614
      // Predicated region
      $region49: #{tpu_custom_call.1} parent=47 // pred_check
        %p616 = pneg %p190
      $region50: #{tpu_custom_call.1} parent=47 // pred_check_branch
        %618 = sbr.rel (%p616) target = $region52
      $region51: #{tpu_custom_call.1} parent=47 // pred_region
        %s619 = smul.u32 8, %s20
      $region52: #{tpu_custom_call.1} parent=47 // pred_fallthru
        _
      // Predicated region
      $region53: #{tpu_custom_call.1} parent=47 // pred_check
        %p620 = pneg %p216
      $region54: #{tpu_custom_call.1} parent=47 // pred_check_branch
        %622 = sbr.rel (%p620) target = $region56
      $region55: #{tpu_custom_call.1} parent=47 // pred_region
        %s623 = smul.u32 8, %s20
      $region56: #{tpu_custom_call.1} parent=47 // pred_fallthru
        _
    $region48: #{tpu_custom_call.1} parent=5 // pred_fallthru
      _
    %p624 = scmp.le.s32.totalorder 2, %s15
    // Predicated region
    $region57: #{tpu_custom_call.1} parent=5 // pred_check
      %p625 = pneg %p624
    $region58: #{tpu_custom_call.1} parent=5 // pred_check_branch
      %627 = sbr.rel (%p625) target = $region60
    $region59: #{tpu_custom_call.1} parent=5 // pred_region
      %s628 = ssub.s32 %s15, 2
      // Predicated region
      $region61: #{tpu_custom_call.1} parent=59 // pred_check
        %p629 = pneg %p196
      $region62: #{tpu_custom_call.1} parent=59 // pred_check_branch
        %631 = sbr.rel (%p629) target = $region64
      $region63: #{tpu_custom_call.1} parent=59 // pred_region
        %s632 = smul.u32 8, %s21
        %p633 = scmp.lt.s32.totalorder %s632, 15
        %s634 = scalar_select %p633, %s632, 15
        %s635 = smul.addr %s634, 4
        %s636 = scalar_lea.vmem %s7, %s635
      $region64: #{tpu_custom_call.1} parent=59 // pred_fallthru
        _
      // Predicated region
      $region65: #{tpu_custom_call.1} parent=59 // pred_check
        %p637 = pneg %p222
      $region66: #{tpu_custom_call.1} parent=59 // pred_check_branch
        %639 = sbr.rel (%p637) target = $region68
      $region67: #{tpu_custom_call.1} parent=59 // pred_region
        %s640 = smul.u32 8, %s21
        %p641 = scmp.lt.s32.totalorder %s640, 15
        %s642 = scalar_select %p641, %s640, 15
        %s643 = smul.addr %s642, 8
        %s644 = scalar_lea.vmem %s8, %s643
      $region68: #{tpu_custom_call.1} parent=59 // pred_fallthru
        _
    $region60: #{tpu_custom_call.1} parent=5 // pred_fallthru
      _
  $region6: #{tpu_custom_call.1} parent=0 // loop_footer
    %s19 = sadd.s32 1, %s15
  $region7: #{tpu_custom_call.1} parent=0 // loop_footer_branch
    %14 = sbr.rel target = $region3
  $region8: #{tpu_custom_call.1} parent=0 // loop_exit
    _

</llo_original>
